<compile_context>
chip_gen: v7x
topology: tpu7x:2x2x1
jax: 0.10.0
libtpu: 0.0.40
codegen_flags: <defaults>
</compile_context>

<pallas_src>
import jax
import jax.numpy as jnp
from jax.experimental import pallas as pl
from jax.experimental.pallas import tpu as pltpu

INPUT_SIZE = 2
HIDDEN_SIZE = 4
OUTPUT_SIZE = 1

LANES = 128      # lane width of a vreg; batch is packed (rows, 128) row-major
S_MAX = 8192     # max sublane rows per tile -> ~12 MB payload / grid step


def _mlp_kernel(params_ref, x_ref, o_ref):
    """params_ref: SMEM (17,) f32 = [w1 (4x2 row-major), b1 (4), w2 (4), b2 (1)]
    x_ref: VMEM (2, S, 128)  -- features on the leading axis, batch packed
           densely on (sublane, lane).
    o_ref: VMEM (S, 128)."""
    x0 = x_ref[0]                           # (S, 128) dense vreg slab, feature 0
    x1 = x_ref[1]                           # (S, 128) feature 1
    acc = jnp.zeros_like(x0)
    # out_const collects b2 + 0.5*sum_j v_j  (all scalar-slot math).
    out_const = params_ref[4 * HIDDEN_SIZE]                # output.bias
    for j in range(HIDDEN_SIZE):            # fully unrolled: 4 hidden units
        # Fold the 0.5 of sigmoid(h) = 0.5*tanh(0.5*h) + 0.5 into the scalars.
        w_j0 = params_ref[2 * j] * 0.5                     # hidden.weight[j, 0]
        w_j1 = params_ref[2 * j + 1] * 0.5                 # hidden.weight[j, 1]
        b_j = params_ref[2 * HIDDEN_SIZE + j] * 0.5        # hidden.bias[j]
        v_j = params_ref[3 * HIDDEN_SIZE + j]              # output.weight[0, j]
        t = jnp.tanh(x0 * w_j0 + x1 * w_j1 + b_j)          # 1 EUP push / unit
        acc = acc + (0.5 * v_j) * t                        # lane/sublane-dense VPU
        out_const = out_const + 0.5 * v_j
    o_ref[...] = acc + out_const


@jax.jit
def mlp_forward(x, w1, b1, w2, b2):
    """x: (B, 2); w1: (4, 2); b1: (4,); w2: (1, 4); b2: (1,)  (nn.Linear layout)."""
    B = x.shape[0]

    # Pack the batch densely onto (sublane, lane): rows of 128 batch elements.
    rows = pl.cdiv(B, LANES)                       # lane-packed rows needed
    S = min(S_MAX, ((rows + 7) // 8) * 8)          # sublane rows per tile (mult. of 8)
    n_tiles = pl.cdiv(rows, S)
    total_rows = n_tiles * S
    Bp = total_rows * LANES

    # One fused pass: transpose to feature-major, pad batch, reshape to slabs.
    xt = jnp.transpose(x.astype(jnp.float32))                  # (2, B)
    xt = jnp.pad(xt, ((0, 0), (0, Bp - B)))                    # (2, Bp)
    xt = xt.reshape(INPUT_SIZE, total_rows, LANES)             # (2, rows, 128)

    params = jnp.concatenate([
        w1.astype(jnp.float32).reshape(-1),                    # 8: w1 row-major
        b1.astype(jnp.float32).reshape(-1),                    # 4
        w2.astype(jnp.float32).reshape(-1),                    # 4
        b2.astype(jnp.float32).reshape(-1),                    # 1
    ])                                                         # (17,)

    flops_per_row = (2 * INPUT_SIZE * HIDDEN_SIZE
                     + 2 * HIDDEN_SIZE * OUTPUT_SIZE
                     + 2 * HIDDEN_SIZE)
    cost = pl.CostEstimate(
        flops=flops_per_row * Bp,
        transcendentals=HIDDEN_SIZE * Bp,
        bytes_accessed=(xt.size + Bp * OUTPUT_SIZE + params.size) * 4,
    )

    out_p = pl.pallas_call(
        _mlp_kernel,
        out_shape=jax.ShapeDtypeStruct((total_rows, LANES), jnp.float32),
        grid_spec=pltpu.PrefetchScalarGridSpec(
            num_scalar_prefetch=1,                             # params -> SMEM
            grid=(n_tiles,),
            in_specs=[
                pl.BlockSpec((INPUT_SIZE, S, LANES), lambda i, p: (0, i, 0)),
            ],
            out_specs=pl.BlockSpec((S, LANES), lambda i, p: (i, 0)),
        ),
        compiler_params=pltpu.CompilerParams(
            # Independent batch tiles -> megacore sharding on v7x.
            dimension_semantics=("parallel",),
            # Max-size tile uses ~24 MB double-buffered; 48 MiB fits v7x's
            # 64 MiB/TC and raises v5e/v6e past their 16/32 MiB defaults.
            vmem_limit_bytes=48 * 1024 * 1024,
        ),
        cost_estimate=cost,
    )(params, xt)

    # Drop batch padding and restore the (B, 1) PyTorch output layout.
    return out_p.reshape(-1)[:B].reshape(B, OUTPUT_SIZE)


if __name__ == "__main__":
    key = jax.random.PRNGKey(0)
    k_x, k_w1, k_b1, k_w2, k_b2 = jax.random.split(key, 5)

    batch = 8
    x = jax.random.normal(k_x, (batch, INPUT_SIZE), dtype=jnp.float32)

    # Deterministic parameter init mimicking nn.Linear's U(-1/sqrt(fan_in), +)
    bound1 = 1.0 / (INPUT_SIZE ** 0.5)
    w1 = jax.random.uniform(k_w1, (HIDDEN_SIZE, INPUT_SIZE),
                            minval=-bound1, maxval=bound1, dtype=jnp.float32)
    b1 = jax.random.uniform(k_b1, (HIDDEN_SIZE,),
                            minval=-bound1, maxval=bound1, dtype=jnp.float32)
    bound2 = 1.0 / (HIDDEN_SIZE ** 0.5)
    w2 = jax.random.uniform(k_w2, (OUTPUT_SIZE, HIDDEN_SIZE),
                            minval=-bound2, maxval=bound2, dtype=jnp.float32)
    b2 = jax.random.uniform(k_b2, (OUTPUT_SIZE,),
                            minval=-bound2, maxval=bound2, dtype=jnp.float32)

    out = mlp_forward(x, w1, b1, w2, b2)
    jax.block_until_ready(out)

    # Pure-JAX reference check (same math, no Pallas).
    ref = jax.nn.sigmoid(x @ w1.T + b1) @ w2.T + b2
    assert out.shape == (batch, OUTPUT_SIZE)
    assert jnp.allclose(out, ref, atol=1e-5, rtol=1e-5)

    print("KERNEL_OK")
</pallas_src>

<mosaic_0001>
module attributes {stable_mosaic.version = 11 : i64} {
  func.func @_mlp_kernel(%arg0: i32, %arg1: memref<17xf32, #tpu.memory_space<smem>>, %arg2: memref<2x8x128xf32, #tpu.memory_space<vmem>>, %arg3: memref<8x128xf32, #tpu.memory_space<vmem>>) attributes {dimension_semantics = [#tpu.dimension_semantics<parallel>], iteration_bounds = array<i64: 1>, scalar_prefetch = 1 : i64, scratch_operands = 0 : i64, tpu.core_type = #tpu.core_type<tc>, window_params = [{transform_indices = @transform_0, window_bounds = array<i64: 2, 8, 128>}, {transform_indices = @transform_1, window_bounds = array<i64: 8, 128>}]} {
    %c0 = arith.constant 0 : index
    %c0_0 = arith.constant 0 : index
    %c0_1 = arith.constant 0 : index
    %0 = vector.load %arg2[%c0, %c0_0, %c0_1] : memref<2x8x128xf32, #tpu.memory_space<vmem>>, vector<1x8x128xf32>
    %1 = vector.shape_cast %0 : vector<1x8x128xf32> to vector<8x128xf32>
    %c1 = arith.constant 1 : index
    %c0_2 = arith.constant 0 : index
    %c0_3 = arith.constant 0 : index
    %2 = vector.load %arg2[%c1, %c0_2, %c0_3] : memref<2x8x128xf32, #tpu.memory_space<vmem>>, vector<1x8x128xf32>
    %3 = vector.shape_cast %2 : vector<1x8x128xf32> to vector<8x128xf32>
    %cst = arith.constant 0.000000e+00 : f32
    %4 = vector.broadcast %cst : f32 to vector<8x128xf32>
    %c16 = arith.constant 16 : index
    %5 = memref.load %arg1[%c16] : memref<17xf32, #tpu.memory_space<smem>>
    %c0_4 = arith.constant 0 : index
    %6 = memref.load %arg1[%c0_4] : memref<17xf32, #tpu.memory_space<smem>>
    %cst_5 = arith.constant 5.000000e-01 : f32
    %7 = arith.mulf %6, %cst_5 : f32
    %c1_6 = arith.constant 1 : index
    %8 = memref.load %arg1[%c1_6] : memref<17xf32, #tpu.memory_space<smem>>
    %cst_7 = arith.constant 5.000000e-01 : f32
    %9 = arith.mulf %8, %cst_7 : f32
    %c8 = arith.constant 8 : index
    %10 = memref.load %arg1[%c8] : memref<17xf32, #tpu.memory_space<smem>>
    %cst_8 = arith.constant 5.000000e-01 : f32
    %11 = arith.mulf %10, %cst_8 : f32
    %c12 = arith.constant 12 : index
    %12 = memref.load %arg1[%c12] : memref<17xf32, #tpu.memory_space<smem>>
    %13 = vector.broadcast %7 : f32 to vector<8x128xf32>
    %14 = arith.mulf %1, %13 : vector<8x128xf32>
    %15 = vector.broadcast %9 : f32 to vector<8x128xf32>
    %16 = arith.mulf %3, %15 : vector<8x128xf32>
    %17 = arith.addf %14, %16 : vector<8x128xf32>
    %18 = vector.broadcast %11 : f32 to vector<8x128xf32>
    %19 = arith.addf %17, %18 : vector<8x128xf32>
    %20 = math.tanh %19 : vector<8x128xf32>
    %cst_9 = arith.constant 5.000000e-01 : f32
    %21 = arith.mulf %cst_9, %12 : f32
    %22 = vector.broadcast %21 : f32 to vector<8x128xf32>
    %23 = arith.mulf %22, %20 : vector<8x128xf32>
    %24 = arith.addf %4, %23 : vector<8x128xf32>
    %cst_10 = arith.constant 5.000000e-01 : f32
    %25 = arith.mulf %cst_10, %12 : f32
    %26 = arith.addf %5, %25 : f32
    %c2 = arith.constant 2 : index
    %27 = memref.load %arg1[%c2] : memref<17xf32, #tpu.memory_space<smem>>
    %cst_11 = arith.constant 5.000000e-01 : f32
    %28 = arith.mulf %27, %cst_11 : f32
    %c3 = arith.constant 3 : index
    %29 = memref.load %arg1[%c3] : memref<17xf32, #tpu.memory_space<smem>>
    %cst_12 = arith.constant 5.000000e-01 : f32
    %30 = arith.mulf %29, %cst_12 : f32
    %c9 = arith.constant 9 : index
    %31 = memref.load %arg1[%c9] : memref<17xf32, #tpu.memory_space<smem>>
    %cst_13 = arith.constant 5.000000e-01 : f32
    %32 = arith.mulf %31, %cst_13 : f32
    %c13 = arith.constant 13 : index
    %33 = memref.load %arg1[%c13] : memref<17xf32, #tpu.memory_space<smem>>
    %34 = vector.broadcast %28 : f32 to vector<8x128xf32>
    %35 = arith.mulf %1, %34 : vector<8x128xf32>
    %36 = vector.broadcast %30 : f32 to vector<8x128xf32>
    %37 = arith.mulf %3, %36 : vector<8x128xf32>
    %38 = arith.addf %35, %37 : vector<8x128xf32>
    %39 = vector.broadcast %32 : f32 to vector<8x128xf32>
    %40 = arith.addf %38, %39 : vector<8x128xf32>
    %41 = math.tanh %40 : vector<8x128xf32>
    %cst_14 = arith.constant 5.000000e-01 : f32
    %42 = arith.mulf %cst_14, %33 : f32
    %43 = vector.broadcast %42 : f32 to vector<8x128xf32>
    %44 = arith.mulf %43, %41 : vector<8x128xf32>
    %45 = arith.addf %24, %44 : vector<8x128xf32>
    %cst_15 = arith.constant 5.000000e-01 : f32
    %46 = arith.mulf %cst_15, %33 : f32
    %47 = arith.addf %26, %46 : f32
    %c4 = arith.constant 4 : index
    %48 = memref.load %arg1[%c4] : memref<17xf32, #tpu.memory_space<smem>>
    %cst_16 = arith.constant 5.000000e-01 : f32
    %49 = arith.mulf %48, %cst_16 : f32
    %c5 = arith.constant 5 : index
    %50 = memref.load %arg1[%c5] : memref<17xf32, #tpu.memory_space<smem>>
    %cst_17 = arith.constant 5.000000e-01 : f32
    %51 = arith.mulf %50, %cst_17 : f32
    %c10 = arith.constant 10 : index
    %52 = memref.load %arg1[%c10] : memref<17xf32, #tpu.memory_space<smem>>
    %cst_18 = arith.constant 5.000000e-01 : f32
    %53 = arith.mulf %52, %cst_18 : f32
    %c14 = arith.constant 14 : index
    %54 = memref.load %arg1[%c14] : memref<17xf32, #tpu.memory_space<smem>>
    %55 = vector.broadcast %49 : f32 to vector<8x128xf32>
    %56 = arith.mulf %1, %55 : vector<8x128xf32>
    %57 = vector.broadcast %51 : f32 to vector<8x128xf32>
    %58 = arith.mulf %3, %57 : vector<8x128xf32>
    %59 = arith.addf %56, %58 : vector<8x128xf32>
    %60 = vector.broadcast %53 : f32 to vector<8x128xf32>
    %61 = arith.addf %59, %60 : vector<8x128xf32>
    %62 = math.tanh %61 : vector<8x128xf32>
    %cst_19 = arith.constant 5.000000e-01 : f32
    %63 = arith.mulf %cst_19, %54 : f32
    %64 = vector.broadcast %63 : f32 to vector<8x128xf32>
    %65 = arith.mulf %64, %62 : vector<8x128xf32>
    %66 = arith.addf %45, %65 : vector<8x128xf32>
    %cst_20 = arith.constant 5.000000e-01 : f32
    %67 = arith.mulf %cst_20, %54 : f32
    %68 = arith.addf %47, %67 : f32
    %c6 = arith.constant 6 : index
    %69 = memref.load %arg1[%c6] : memref<17xf32, #tpu.memory_space<smem>>
    %cst_21 = arith.constant 5.000000e-01 : f32
    %70 = arith.mulf %69, %cst_21 : f32
    %c7 = arith.constant 7 : index
    %71 = memref.load %arg1[%c7] : memref<17xf32, #tpu.memory_space<smem>>
    %cst_22 = arith.constant 5.000000e-01 : f32
    %72 = arith.mulf %71, %cst_22 : f32
    %c11 = arith.constant 11 : index
    %73 = memref.load %arg1[%c11] : memref<17xf32, #tpu.memory_space<smem>>
    %cst_23 = arith.constant 5.000000e-01 : f32
    %74 = arith.mulf %73, %cst_23 : f32
    %c15 = arith.constant 15 : index
    %75 = memref.load %arg1[%c15] : memref<17xf32, #tpu.memory_space<smem>>
    %76 = vector.broadcast %70 : f32 to vector<8x128xf32>
    %77 = arith.mulf %1, %76 : vector<8x128xf32>
    %78 = vector.broadcast %72 : f32 to vector<8x128xf32>
    %79 = arith.mulf %3, %78 : vector<8x128xf32>
    %80 = arith.addf %77, %79 : vector<8x128xf32>
    %81 = vector.broadcast %74 : f32 to vector<8x128xf32>
    %82 = arith.addf %80, %81 : vector<8x128xf32>
    %83 = math.tanh %82 : vector<8x128xf32>
    %cst_24 = arith.constant 5.000000e-01 : f32
    %84 = arith.mulf %cst_24, %75 : f32
    %85 = vector.broadcast %84 : f32 to vector<8x128xf32>
    %86 = arith.mulf %85, %83 : vector<8x128xf32>
    %87 = arith.addf %66, %86 : vector<8x128xf32>
    %cst_25 = arith.constant 5.000000e-01 : f32
    %88 = arith.mulf %cst_25, %75 : f32
    %89 = arith.addf %68, %88 : f32
    %90 = vector.broadcast %89 : f32 to vector<8x128xf32>
    %91 = arith.addf %87, %90 : vector<8x128xf32>
    %c0_26 = arith.constant 0 : index
    %c0_27 = arith.constant 0 : index
    %92 = vector.load %arg3[%c0_26, %c0_27] : memref<8x128xf32, #tpu.memory_space<vmem>>, vector<8x128xf32>
    tpu.vector_store %arg3[%c0_26, %c0_27], %91 {strides = array<i32>} : memref<8x128xf32, #tpu.memory_space<vmem>>, vector<8x128xf32>,
    return
  }
  func.func @transform_0(%arg0: i32, %arg1: memref<17xf32, #tpu.memory_space<smem>>) -> (i32, i32, i32) {
    %c0_i32 = arith.constant 0 : i32
    %c0_i32_0 = arith.constant 0 : i32
    %c0_i32_1 = arith.constant 0 : i32
    return %c0_i32, %arg0, %c0_i32_0 : i32, i32, i32
  }
  func.func @transform_1(%arg0: i32, %arg1: memref<17xf32, #tpu.memory_space<smem>>) -> (i32, i32) {
    %c0_i32 = arith.constant 0 : i32
    %c0_i32_0 = arith.constant 0 : i32
    return %arg0, %c0_i32 : i32, i32
  }
}

</mosaic_0001>

<llo_original>
// kernel: mlp_forward.1
$region0: #{mlp_forward.1}
  #allocation0 [shape = 'u32[]', space=smem, size = 0x4, offset = 0x4, fixed_abs, tag = 'smem constant byte address 0x4 - core index']
  #allocation1 [shape = 'u32[144,128]{1,0:T(1,128)}', space=vmem, size = 0x12000, scoped, tag = 'internal scratch']
  #allocation2 [shape = 's32[1]{0}', space=sflag, size = 0x4, scoped, tag = 'scoped memory for mlp_forward.1']
  #allocation3 [shape = 'u8[512]{0}', space=smem, size = 0x200, scoped, tag = 'prefetched SMEM operand 0']
  %s0 = inlined_call_operand.vmem [shape: f32[17], index: 0, kind: input, shape index: {}]
  %s1 = inlined_call_operand.vmem [shape: f32[2,8,128], index: 1, kind: input, shape index: {}]
  %s2 = inlined_call_operand.vmem [shape: f32[8,128], index: 2, kind: output, shape index: {}]
  %s3 = sld [smem:[#allocation0]]
  $region14: #{mlp_forward.1} parent=0
    _
  %s5 = ssub.s32 1, %s3
  %s6 = scalar_select 0, %s5, %s3
  %s7 = sshll.u32 %s0, 4
  %s8 = int_to_ptr.vmem [resolvable:$true] %s7
  %10 = dma.vmem_to_smem %s8, 16, [#allocation3], [#allocation2]
  %11 = dma.done [#allocation2], 16
  %12 = sfence
  // Predicated region
  $region2: #{mlp_forward.1} parent=0 // pred_check
    _
  $region3: #{mlp_forward.1} parent=0 // pred_check_branch
    %14 = sbr.rel (0) target = $region5
  $region4: #{mlp_forward.1} parent=0 // pred_region
    _
  $region5: #{mlp_forward.1} parent=0 // pred_fallthru
    _
  %v15 = vld [vmem:[%s1] sm:$0xff]
  %s16 = scalar_lea.vmem %s1, 8
  %v17 = vld [vmem:[%s16] sm:$0xff]
  %s18 = sld [smem:[#allocation3 + $0x10]]
  %s19 = sld [smem:[#allocation3]]
  %s20 = smul.f32 %s19, 0.5
  %s21 = sld [smem:[#allocation3 + $0x1]]
  %s22 = smul.f32 %s21, 0.5
  %s23 = sld [smem:[#allocation3 + $0x8]]
  %s24 = smul.f32 %s23, 0.5
  %s25 = sld [smem:[#allocation3 + $0xc]]
  %v26 = vstv %s20
  %v27 = vmul.f32 %v15, %v26
  %v28 = vstv %s22
  %v29 = vmul.f32 %v17, %v28
  %v30 = vadd.f32 %v27, %v29
  %v31 = vstv %s24
  %v32 = vadd.f32 %v30, %v31
  %v33 = vtanh.pop %v32
  %s34 = smul.f32 %s25, 0.5
  %v35 = vstv %s34
  %v36 = vmul.f32 %v35, %v33
  %v37 = vadd.f32 %v36, 0.0
  %s38 = sadd.f32 %s18, %s34
  %s39 = sld [smem:[#allocation3 + $0x2]]
  %s40 = smul.f32 %s39, 0.5
  %s41 = sld [smem:[#allocation3 + $0x3]]
  %s42 = smul.f32 %s41, 0.5
  %s43 = sld [smem:[#allocation3 + $0x9]]
  %s44 = smul.f32 %s43, 0.5
  %s45 = sld [smem:[#allocation3 + $0xd]]
  %v46 = vstv %s40
  %v47 = vmul.f32 %v15, %v46
  %v48 = vstv %s42
  %v49 = vmul.f32 %v17, %v48
  %v50 = vadd.f32 %v47, %v49
  %v51 = vstv %s44
  %v52 = vadd.f32 %v50, %v51
  %v53 = vtanh.pop %v52
  %s54 = smul.f32 %s45, 0.5
  %v55 = vstv %s54
  %v56 = vmul.f32 %v55, %v53
  %v57 = vadd.f32 %v37, %v56
  %s58 = sadd.f32 %s38, %s54
  %s59 = sld [smem:[#allocation3 + $0x4]]
  %s60 = smul.f32 %s59, 0.5
  %s61 = sld [smem:[#allocation3 + $0x5]]
  %s62 = smul.f32 %s61, 0.5
  %s63 = sld [smem:[#allocation3 + $0xa]]
  %s64 = smul.f32 %s63, 0.5
  %s65 = sld [smem:[#allocation3 + $0xe]]
  %v66 = vstv %s60
  %v67 = vmul.f32 %v15, %v66
  %v68 = vstv %s62
  %v69 = vmul.f32 %v17, %v68
  %v70 = vadd.f32 %v67, %v69
  %v71 = vstv %s64
  %v72 = vadd.f32 %v70, %v71
  %v73 = vtanh.pop %v72
  %s74 = smul.f32 %s65, 0.5
  %v75 = vstv %s74
  %v76 = vmul.f32 %v75, %v73
  %v77 = vadd.f32 %v57, %v76
  %s78 = sadd.f32 %s58, %s74
  %s79 = sld [smem:[#allocation3 + $0x6]]
  %s80 = smul.f32 %s79, 0.5
  %s81 = sld [smem:[#allocation3 + $0x7]]
  %s82 = smul.f32 %s81, 0.5
  %s83 = sld [smem:[#allocation3 + $0xb]]
  %s84 = smul.f32 %s83, 0.5
  %s85 = sld [smem:[#allocation3 + $0xf]]
  %v86 = vstv %s80
  %v87 = vmul.f32 %v15, %v86
  %v88 = vstv %s82
  %v89 = vmul.f32 %v17, %v88
  %v90 = vadd.f32 %v87, %v89
  %v91 = vstv %s84
  %v92 = vadd.f32 %v90, %v91
  %v93 = vtanh.pop %v92
  %s94 = smul.f32 %s85, 0.5
  %v95 = vstv %s94
  %v96 = vmul.f32 %v95, %v93
  %v97 = vadd.f32 %v77, %v96
  %s98 = sadd.f32 %s78, %s94
  %v99 = vstv %s98
  %v100 = vadd.f32 %v97, %v99
  %101 = vst [vmem:[%s2] sm:$0xff] %v100
  // Predicated region
  $region6: #{mlp_forward.1} parent=0 // pred_check
    _
  $region7: #{mlp_forward.1} parent=0 // pred_check_branch
    %103 = sbr.rel (0) target = $region9
  $region8: #{mlp_forward.1} parent=0 // pred_region
    _
  $region9: #{mlp_forward.1} parent=0 // pred_fallthru
    _
  // Predicated region
  $region10: #{mlp_forward.1} parent=0 // pred_check
    _
  $region11: #{mlp_forward.1} parent=0 // pred_check_branch
    %105 = sbr.rel (0) target = $region13
  $region12: #{mlp_forward.1} parent=0 // pred_region
    _
  $region13: #{mlp_forward.1} parent=0 // pred_fallthru
    _

</llo_original>
